<compile_context>
chip_gen: v7x
topology: tpu7x:2x2x1
jax: 0.10.0
libtpu: 0.0.40
codegen_flags: <defaults>
</compile_context>

<pallas_src>
import functools

import jax
import jax.numpy as jnp
from jax.experimental import pallas as pl
from jax.experimental.pallas import tpu as pltpu


def get_same_pad(h, w, kh, kw, s):
    # verbatim port of the PyTorch helper
    if h % s[0] == 0:
        pad_along_height = max(kh - s[0], 0)
    else:
        pad_along_height = max(kh - h % s[0], 0)
    if w % s[1] == 0:
        pad_along_width = max(kw - s[1], 0)
    else:
        pad_along_width = max(kw - w % s[1], 0)
    pad_top = pad_along_height // 2
    pad_bottom = pad_along_height - pad_top
    pad_left = pad_along_width // 2
    pad_right = pad_along_width - pad_left
    return {'left': pad_left, 'right': pad_right, 'top': pad_top, 'bottom': pad_bottom}


def _conv_kernel(x_ref, w_ref, b_ref, o_ref):
    """One fused conv per grid step (single MXU matmul + bias).

    x_ref: (K, NL)    im2col RHS for this side; K = Cin*KH*KW, NL = B*Ho*Wo (128-multiple)
    w_ref: (Cout, K)  flattened conv weight
    b_ref: (Cout, 1)
    o_ref: (Cout, NL) lane-dense output slab
    """
    acc = jnp.dot(w_ref[...], x_ref[...], preferred_element_type=jnp.float32)
    o_ref[...] = (acc + b_ref[...].astype(jnp.float32)).astype(o_ref.dtype)


def _conv2d_same_reflect_sides(xs, weight, bias):
    """ConvSamePad._forward applied to S groups of B images in one pallas_call.

    xs: (S, B, Cin, H, W)  ->  (S, Cout, B, Ho, Wo)

    Grid = (S,), side axis "parallel" (one side per TensorCore on v7x); within a
    step all B images are folded into the matmul lane dimension.
    """
    S, B, Cin, H, W = xs.shape
    Cout, Cin_w, KH, KW = weight.shape
    assert Cin == Cin_w
    # TODO(synk): general strides not implemented (module default stride=(1,1)).

    # Same (intentionally swapped-looking) argument mapping as the torch code.
    sp = get_same_pad(W, H, KW, KH, (1, 1))
    # reflect padding requires pad < dim on each padded axis
    assert sp['left'] < H and sp['right'] < H and sp['top'] < W and sp['bottom'] < W

    Hp = H + sp['left'] + sp['right']
    Wp = W + sp['top'] + sp['bottom']
    Ho, Wo = Hp - KH + 1, Wp - KW + 1          # == H, W for stride 1

    K = Cin * KH * KW
    NL = B * Ho * Wo
    NLp = pl.cdiv(NL, 128) * 128               # lane-dense (unmasked) loads/stores

    # (S, B, Cin, H, W) -> (S, Cin, B, H, W); reflect-pad the spatial dims.
    xt = jnp.transpose(xs, (0, 2, 1, 3, 4))
    xp = jnp.pad(
        xt,
        ((0, 0), (0, 0), (0, 0),
         (sp['left'], sp['right']), (sp['top'], sp['bottom'])),
        mode='reflect')                         # (S, Cin, B, Hp, Wp)

    # im2col: stack the KH*KW shifted windows -> (S, Cin*KH*KW, B*Ho*Wo).
    # Tap ordering (dh*KW + dw) matches weight.reshape(Cout, Cin*KH*KW).
    taps = [xp[..., dh:dh + Ho, dw:dw + Wo]
            for dh in range(KH) for dw in range(KW)]   # each (S, Cin, B, Ho, Wo)
    rhs = jnp.stack(taps, axis=2).reshape(S, K, NL)
    if NLp != NL:
        rhs = jnp.pad(rhs, ((0, 0), (0, 0), (0, NLp - NL)))

    w2 = weight.reshape(Cout, K)                # single 2D weight slab, one VMEM tile
    b2 = bias.reshape(Cout, 1)

    out = pl.pallas_call(
        _conv_kernel,
        out_shape=jax.ShapeDtypeStruct((S, Cout, NLp), xs.dtype),
        grid=(S,),
        in_specs=[
            pl.BlockSpec((None, K, NLp), lambda s: (s, 0, 0)),
            pl.BlockSpec((Cout, K), lambda s: (0, 0)),
            pl.BlockSpec((Cout, 1), lambda s: (0, 0)),
        ],
        out_specs=pl.BlockSpec((None, Cout, NLp), lambda s: (s, 0, 0)),
        compiler_params=pltpu.CompilerParams(
            dimension_semantics=("parallel",)),   # one side per TC on v7x; no-op on v5e/v6e
    )(rhs, w2, b2)

    return out[..., :NL].reshape(S, Cout, B, Ho, Wo)


@functools.partial(jax.jit, static_argnames=("apply_per_side",))
def conv_same_pad_forward(x, weight, bias, apply_per_side=True):
    """Equivalent of ConvSamePad.forward, x: (B, C, time, nc)."""
    B, C, T, NC = x.shape
    Cout = weight.shape[0]
    if apply_per_side:
        side = NC // 2
        xs = jnp.stack([x[..., :side], x[..., side:]], axis=0)   # (2, B, C, T, side)
        o = _conv2d_same_reflect_sides(xs, weight, bias)         # (2, Cout, B, T, side)
        # einops: 'sides b c time hnc -> b c time (hnc sides)'   (interleave sides)
        o = jnp.transpose(o, (2, 1, 3, 4, 0))                    # (B, Cout, T, side, 2)
        return o.reshape(B, Cout, T, side * 2)
    o = _conv2d_same_reflect_sides(x[None], weight, bias)        # (1, Cout, B, T, NC)
    return jnp.transpose(o[0], (1, 0, 2, 3))                     # (B, Cout, T, NC)


if __name__ == "__main__":
    key = jax.random.PRNGKey(0)
    kx, kw, kb = jax.random.split(key, 3)

    # ConvSamePad(apply_per_side=True, in_channels=4, out_channels=8, kernel_size=3)
    B, Cin, T, NC = 2, 4, 16, 16
    Cout, KH, KW = 8, 3, 3

    x = jax.random.normal(kx, (B, Cin, T, NC), jnp.float32)
    weight = jax.random.normal(kw, (Cout, Cin, KH, KW), jnp.float32) * 0.1
    bias = jax.random.normal(kb, (Cout,), jnp.float32) * 0.1

    out = jax.block_until_ready(
        conv_same_pad_forward(x, weight, bias, apply_per_side=True))
    assert out.shape == (B, Cout, T, NC), out.shape

    # Pure-JAX reference (same padding + lax conv) for a correctness check.
    def ref_side(xs):
        sp = get_same_pad(xs.shape[3], xs.shape[2], KW, KH, (1, 1))
        xp = jnp.pad(xs, ((0, 0), (0, 0),
                          (sp['left'], sp['right']),
                          (sp['top'], sp['bottom'])), mode='reflect')
        y = jax.lax.conv_general_dilated(
            xp, weight, (1, 1), 'VALID',
            dimension_numbers=('NCHW', 'OIHW', 'NCHW'))
        return y + bias.reshape(1, Cout, 1, 1)

    side = NC // 2
    ref = jnp.stack([ref_side(x[..., :side]), ref_side(x[..., side:])],
                    axis=-1).reshape(B, Cout, T, NC)
    assert jnp.allclose(out, ref, atol=1e-4, rtol=1e-4), \
        float(jnp.max(jnp.abs(out - ref)))

    print("KERNEL_OK")
</pallas_src>

<mosaic_0001>
module attributes {stable_mosaic.version = 11 : i64} {
  func.func @_conv_kernel(%arg0: i32, %arg1: memref<1x36x256xf32, #tpu.memory_space<vmem>>, %arg2: memref<8x36xf32, #tpu.memory_space<vmem>>, %arg3: memref<8x1xf32, #tpu.memory_space<vmem>>, %arg4: memref<1x8x256xf32, #tpu.memory_space<vmem>>) attributes {dimension_semantics = [#tpu.dimension_semantics<parallel>], iteration_bounds = array<i64: 2>, scalar_prefetch = 0 : i64, scratch_operands = 0 : i64, tpu.core_type = #tpu.core_type<tc>, window_params = [{transform_indices = @transform_0, window_bounds = array<i64: 1, 36, 256>}, {pipeline_mode = #tpu.pipeline_mode<synchronous>, transform_indices = @transform_1, window_bounds = array<i64: 8, 36>}, {pipeline_mode = #tpu.pipeline_mode<synchronous>, transform_indices = @transform_2, window_bounds = array<i64: 8, 1>}, {transform_indices = @transform_3, window_bounds = array<i64: 1, 8, 256>}]} {
    %c0 = arith.constant 0 : index
    %c0_0 = arith.constant 0 : index
    %0 = vector.load %arg2[%c0, %c0_0] : memref<8x36xf32, #tpu.memory_space<vmem>>, vector<8x36xf32>
    %c0_1 = arith.constant 0 : index
    %c0_2 = arith.constant 0 : index
    %c0_3 = arith.constant 0 : index
    %1 = vector.load %arg1[%c0_1, %c0_2, %c0_3] : memref<1x36x256xf32, #tpu.memory_space<vmem>>, vector<1x36x256xf32>
    %2 = vector.shape_cast %1 : vector<1x36x256xf32> to vector<36x256xf32>
    %cst = arith.constant dense<0.000000e+00> : vector<8x256xf32>
    %3 = tpu.matmul %0, %2, %cst {dimension_numbers = #tpu.dot_dimension_numbers<[1], [0], [0], [1], [0, 0, 1, 1], [], []>} : vector<8x36xf32>, vector<36x256xf32>, vector<8x256xf32> -> vector<8x256xf32>
    %c0_4 = arith.constant 0 : index
    %c0_5 = arith.constant 0 : index
    %4 = vector.load %arg3[%c0_4, %c0_5] : memref<8x1xf32, #tpu.memory_space<vmem>>, vector<8x1xf32>
    %5 = vector.broadcast %4 : vector<8x1xf32> to vector<8x256xf32>
    %6 = arith.addf %3, %5 : vector<8x256xf32>
    %c0_6 = arith.constant 0 : index
    %c0_7 = arith.constant 0 : index
    %c0_8 = arith.constant 0 : index
    %7 = vector.load %arg4[%c0_6, %c0_7, %c0_8] : memref<1x8x256xf32, #tpu.memory_space<vmem>>, vector<1x8x256xf32>
    %8 = vector.shape_cast %7 : vector<1x8x256xf32> to vector<8x256xf32>
    %9 = vector.shape_cast %6 : vector<8x256xf32> to vector<1x8x256xf32>
    tpu.vector_store %arg4[%c0_6, %c0_7, %c0_8], %9 {strides = array<i32>} : memref<1x8x256xf32, #tpu.memory_space<vmem>>, vector<1x8x256xf32>,
    return
  }
  func.func @transform_0(%arg0: i32) -> (i32, i32, i32) {
    %c0_i32 = arith.constant 0 : i32
    %c0_i32_0 = arith.constant 0 : i32
    %c0_i32_1 = arith.constant 0 : i32
    return %arg0, %c0_i32, %c0_i32_0 : i32, i32, i32
  }
  func.func @transform_1(%arg0: i32) -> (i32, i32) {
    %c0_i32 = arith.constant 0 : i32
    %c0_i32_0 = arith.constant 0 : i32
    %c0_i32_1 = arith.constant 0 : i32
    return %c0_i32, %c0_i32_0 : i32, i32
  }
  func.func @transform_2(%arg0: i32) -> (i32, i32) {
    %c0_i32 = arith.constant 0 : i32
    %c0_i32_0 = arith.constant 0 : i32
    %c0_i32_1 = arith.constant 0 : i32
    return %c0_i32, %c0_i32_0 : i32, i32
  }
  func.func @transform_3(%arg0: i32) -> (i32, i32, i32) {
    %c0_i32 = arith.constant 0 : i32
    %c0_i32_0 = arith.constant 0 : i32
    %c0_i32_1 = arith.constant 0 : i32
    return %arg0, %c0_i32, %c0_i32_0 : i32, i32, i32
  }
}

</mosaic_0001>

<llo_original>
// kernel: conv_same_pad_forward.1
$region0: #{conv_same_pad_forward.1}
  #allocation0 [shape = 'u32[]', space=smem, size = 0x4, offset = 0x4, fixed_abs, tag = 'smem constant byte address 0x4 - core index']
  #allocation1 [shape = 'u32[144,128]{1,0:T(1,128)}', space=vmem, size = 0x12000, scoped, tag = 'internal scratch']
  %s0 = inlined_call_operand.vmem [shape: f32[2,36,256], index: 0, kind: input, shape index: {}]
  %s1 = inlined_call_operand.vmem [shape: f32[8,36], index: 1, kind: input, shape index: {}]
  %s2 = inlined_call_operand.vmem [shape: f32[8,1], index: 2, kind: input, shape index: {}]
  %s3 = inlined_call_operand.vmem [shape: f32[2,8,256], index: 3, kind: output, shape index: {}]
  %s4 = sld [smem:[#allocation0]]
  $region45: #{conv_same_pad_forward.1} parent=0
    _
  %s6 = ssub.s32 1, %s4
  %s7 = scalar_select 0, %s6, %s4
  loop: start=0, step=1, limit=4
  $region2: #{conv_same_pad_forward.1} parent=0 // loop_pre_header
    _
  $region3: #{conv_same_pad_forward.1} parent=0 // loop_header
    %s9 = sphi 0, %s13
    %p10 = scmp.ge.s32.totalorder %s9, 4
    %s19 = sphi 0, %s21
    %s22 = sphi 0, %s19
    %s23 = sphi 0, %s22
    %s39 = sphi 0, %s23
    %s43 = sphi 0, %s43
    %s45 = sphi 0, %s43
    %s46 = sphi 0, %s45
    %s60 = sphi 0, %s46
    %s64 = sphi 0, %s64
    %s66 = sphi 0, %s64
    %s67 = sphi 0, %s66
    %s81 = sphi 0, %s67
    %s87 = sphi 0, %s89
    %s90 = sphi 0, %s87
    %s91 = sphi 0, %s90
    %s107 = sphi 0, %s91
  $region4: #{conv_same_pad_forward.1} parent=0 // loop_header_branch
    %12 = sbr.rel (%p10) target = $region8
  $region5: #{conv_same_pad_forward.1} parent=0 // loop_body
    %s14 = ssub.s32 %s9, 1
    %s15 = ssub.s32 %s9, 2
    %s16 = sadd.s32 %s9, 1
    %s17 = ssub.s32 %s9, %s16
    %p18 = scmp.eq.s32.totalorder %s17, 0
    %s20 = sadd.s32 %s19, 1
    %s21 = scalar_select %p18, %s19, %s20
    %p24 = pneg %p18
    %p25 = scmp.eq.s32.totalorder %s9, 1
    %p26 = por %p24, %p25
    %p27 = scmp.ne.s32.totalorder %s19, %s22
    %p28 = scmp.eq.s32.totalorder %s9, 0
    %p29 = por %p27, %p28
    %p30 = scmp.ne.s32.totalorder %s19, %s22
    %p31 = scmp.eq.s32.totalorder %s14, 1
    %p32 = por %p30, %p31
    %p33 = scmp.ne.s32.totalorder %s22, %s23
    %p34 = scmp.eq.s32.totalorder %s14, 0
    %p35 = por %p33, %p34
    %p36 = scmp.ne.s32.totalorder %s22, %s23
    %p37 = scmp.eq.s32.totalorder %s15, 1
    %p38 = por %p36, %p37
    %p40 = scmp.ne.s32.totalorder %s23, %s39
    %p41 = scmp.eq.s32.totalorder %s15, 0
    %p42 = por %p40, %p41
    %s44 = sadd.s32 %s43, 1
    %p47 = scmp.eq.s32.totalorder %s9, 1
    %p48 = scmp.ne.s32.totalorder %s43, %s45
    %p49 = scmp.eq.s32.totalorder %s9, 0
    %p50 = por %p48, %p49
    %p51 = scmp.ne.s32.totalorder %s43, %s45
    %p52 = scmp.eq.s32.totalorder %s14, 1
    %p53 = por %p51, %p52
    %p54 = scmp.ne.s32.totalorder %s45, %s46
    %p55 = scmp.eq.s32.totalorder %s14, 0
    %p56 = por %p54, %p55
    %p57 = scmp.ne.s32.totalorder %s45, %s46
    %p58 = scmp.eq.s32.totalorder %s15, 1
    %p59 = por %p57, %p58
    %p61 = scmp.ne.s32.totalorder %s46, %s60
    %p62 = scmp.eq.s32.totalorder %s15, 0
    %p63 = por %p61, %p62
    %s65 = sadd.s32 %s64, 1
    %p68 = scmp.eq.s32.totalorder %s9, 1
    %p69 = scmp.ne.s32.totalorder %s64, %s66
    %p70 = scmp.eq.s32.totalorder %s9, 0
    %p71 = por %p69, %p70
    %p72 = scmp.ne.s32.totalorder %s64, %s66
    %p73 = scmp.eq.s32.totalorder %s14, 1
    %p74 = por %p72, %p73
    %p75 = scmp.ne.s32.totalorder %s66, %s67
    %p76 = scmp.eq.s32.totalorder %s14, 0
    %p77 = por %p75, %p76
    %p78 = scmp.ne.s32.totalorder %s66, %s67
    %p79 = scmp.eq.s32.totalorder %s15, 1
    %p80 = por %p78, %p79
    %p82 = scmp.ne.s32.totalorder %s67, %s81
    %p83 = scmp.eq.s32.totalorder %s15, 0
    %p84 = por %p82, %p83
    %s85 = ssub.s32 %s9, %s16
    %p86 = scmp.eq.s32.totalorder %s85, 0
    %s88 = sadd.s32 %s87, 1
    %s89 = scalar_select %p86, %s87, %s88
    %p92 = pneg %p86
    %p93 = scmp.eq.s32.totalorder %s9, 1
    %p94 = por %p92, %p93
    %p95 = scmp.ne.s32.totalorder %s87, %s90
    %p96 = scmp.eq.s32.totalorder %s9, 0
    %p97 = por %p95, %p96
    %p98 = scmp.ne.s32.totalorder %s87, %s90
    %p99 = scmp.eq.s32.totalorder %s14, 1
    %p100 = por %p98, %p99
    %p101 = scmp.ne.s32.totalorder %s90, %s91
    %p102 = scmp.eq.s32.totalorder %s14, 0
    %p103 = por %p101, %p102
    %p104 = scmp.ne.s32.totalorder %s90, %s91
    %p105 = scmp.eq.s32.totalorder %s15, 1
    %p106 = por %p104, %p105
    %p108 = scmp.ne.s32.totalorder %s91, %s107
    %p109 = scmp.eq.s32.totalorder %s15, 0
    %p110 = por %p108, %p109
    %p111 = scmp.le.s32.totalorder 1, %s9
    %p112 = scmp.lt.s32.totalorder %s9, 3
    %p113 = pnand %p111, %p112
    %p114 = pneg %p113
    // Predicated region
    $region9: #{conv_same_pad_forward.1} parent=5 // pred_check
      _
    $region10: #{conv_same_pad_forward.1} parent=5 // pred_check_branch
      %116 = sbr.rel (%p113) target = $region12
    $region11: #{conv_same_pad_forward.1} parent=5 // pred_region
      %s117 = ssub.s32 %s9, 1
      // Predicated region
      $region13: #{conv_same_pad_forward.1} parent=11 // pred_check
        %p118 = pneg %p56
      $region14: #{conv_same_pad_forward.1} parent=11 // pred_check_branch
        %120 = sbr.rel (%p118) target = $region16
      $region15: #{conv_same_pad_forward.1} parent=11 // pred_region
        _
      $region16: #{conv_same_pad_forward.1} parent=11 // pred_fallthru
        _
      // Predicated region
      $region17: #{conv_same_pad_forward.1} parent=11 // pred_check
        %p121 = pneg %p77
      $region18: #{conv_same_pad_forward.1} parent=11 // pred_check_branch
        %123 = sbr.rel (%p121) target = $region20
      $region19: #{conv_same_pad_forward.1} parent=11 // pred_region
        _
      $region20: #{conv_same_pad_forward.1} parent=11 // pred_fallthru
        _
    $region12: #{conv_same_pad_forward.1} parent=5 // pred_fallthru
      _
    %p124 = scmp.lt.s32.totalorder %s9, 2
    // Predicated region
    $region21: #{conv_same_pad_forward.1} parent=5 // pred_check
      %p125 = pneg %p124
    $region22: #{conv_same_pad_forward.1} parent=5 // pred_check_branch
      %127 = sbr.rel (%p125) target = $region24
    $region23: #{conv_same_pad_forward.1} parent=5 // pred_region
      // Predicated region
      $region25: #{conv_same_pad_forward.1} parent=23 // pred_check
        %p128 = pneg %p29
      $region26: #{conv_same_pad_forward.1} parent=23 // pred_check_branch
        %130 = sbr.rel (%p128) target = $region28
      $region27: #{conv_same_pad_forward.1} parent=23 // pred_region
        %p131 = scmp.lt.s32.totalorder %s9, 1
        %s132 = scalar_select %p131, %s9, 1
        %s133 = smul.addr %s132, 10
        %s134 = smul.addr %s133, 8
        %s135 = scalar_lea.vmem %s0, %s134
      $region28: #{conv_same_pad_forward.1} parent=23 // pred_fallthru
        _
    $region24: #{conv_same_pad_forward.1} parent=5 // pred_fallthru
      _
    %p136 = scmp.le.s32.totalorder 1, %s9
    %p137 = scmp.lt.s32.totalorder %s9, 3
    %p138 = pnand %p136, %p137
    %p139 = pneg %p138
    // Predicated region
    $region29: #{conv_same_pad_forward.1} parent=5 // pred_check
      _
    $region30: #{conv_same_pad_forward.1} parent=5 // pred_check_branch
      %141 = sbr.rel (%p138) target = $region32
    $region31: #{conv_same_pad_forward.1} parent=5 // pred_region
      %s142 = ssub.s32 %s9, 1
      %p143 = scmp.lt.s32.totalorder %s14, 1
      %s144 = scalar_select %p143, %s14, 1
      %s145 = smul.addr %s144, 10
      %s146 = smul.addr %s145, 8
      %s147 = scalar_lea.vmem %s0, %s146
      %p148 = pneg %p35
      %p149 = pneg %p32
      %p150 = pneg %p56
      %p151 = pneg %p53
      %p152 = pneg %p77
      %p153 = pneg %p74
      %p154 = pneg %p103
      %p155 = pneg %p100
      %p156 = scmp.lt.s32.totalorder %s14, 1
      %s157 = scalar_select %p156, %s14, 1
      %s158 = smul.addr %s157, 2
      %s159 = smul.addr %s158, 8
      %s160 = scalar_lea.vmem %s3, %s159
      %p161 = scmp.lt.s32.totalorder %s14, 1
      %s162 = scalar_select %p161, %s14, 1
      %s163 = smul.addr %s162, 10
      %s164 = smul.addr %s163, 8
      %s165 = scalar_lea.vmem %s0, %s164
      %p166 = scmp.lt.s32.totalorder %s14, 1
      %s167 = scalar_select %p166, %s14, 1
      %s168 = smul.addr %s167, 2
      %s169 = smul.addr %s168, 8
      %s170 = scalar_lea.vmem %s3, %s169
      %v171 = vld [vmem:[%s1] sm:$0xff]
      %v172 = vld [vmem:[%s165] sm:$0xff]
      %v173 = vld [vmem:[%s165 + $0x8] sm:$0xff]
      %v174 = vld [vmem:[%s165 + $0x10] sm:$0xff]
      %v175 = vld [vmem:[%s165 + $0x18] sm:$0xff]
      %v176 = vld [vmem:[%s165 + $0x20] sm:$0xff]
      %v177 = vld [vmem:[%s165 + $0x28] sm:$0xff]
      %v178 = vld [vmem:[%s165 + $0x30] sm:$0xff]
      %v179 = vld [vmem:[%s165 + $0x38] sm:$0xff]
      %v180 = vld [vmem:[%s165 + $0x40] sm:$0xf]
      %v181 = vld [vmem:[%s165 + $0x48] sm:$0xf]
      %v182 = vld [vmem:[%s2] sm:$0xff]
      %184 = vset.pattern.permute.xlu0 0
      %185 = vperm.xlu0 %184, %v182
      %v186 = vpop.permute.xlu0 %185
      %vm188 = vcmask 293888
      %v190 = vsel %vm188, %v171, 0
      %vm192 = vcmask 1043456
      %v194 = vsel %vm192, %v180, 0
      %v197 = vsel %vm192, %v181, 0
      %199 = vmatprep.subr.mxu0 %v173
      %200 = vmatpush1.msra.mxu0 %v172
      %201 = vmatprep.subr.mxu0 %v175
      %202 = vmatpush1.msra.mxu0 %v174
      %203 = vmatprep.subr.mxu0 %v177
      %204 = vmatpush1.msra.mxu0 %v176
      %205 = vmatprep.subr.mxu0 %v179
      %206 = vmatpush1.msra.mxu0 %v178
      %207 = vmatprep.subr.mxu0 %v197
      %208 = vmatpush1.msra.mxu0 %v194
      %209 = vmatprep.subr.mxu0 0.0
      %210 = vmatpush1.msra.mxu0 0.0
      %211 = vmatprep.subr.mxu0 0.0
      %212 = vmatpush1.msra.mxu0 0.0
      %213 = vmatprep.subr.mxu0 0.0
      %214 = vmatpush1.msra.mxu0 0.0
      %215 = vmatprep.subr.mxu0 0.0
      %216 = vmatpush1.msra.mxu0 0.0
      %217 = vmatprep.subr.mxu0 0.0
      %218 = vmatpush1.msra.mxu0 0.0
      %219 = vmatprep.subr.mxu0 0.0
      %220 = vmatpush1.msra.mxu0 0.0
      %221 = vmatprep.subr.mxu0 0.0
      %222 = vmatpush1.msra.mxu0 0.0
      %223 = vmatprep.subr.mxu0 0.0
      %224 = vmatpush1.msra.mxu0 0.0
      %225 = vmatprep.subr.mxu0 0.0
      %226 = vmatpush1.msra.mxu0 0.0
      %227 = vmatprep.subr.mxu0 0.0
      %228 = vmatpush1.msra.mxu0 0.0
      %229 = vmatprep.subr.mxu0 0.0
      %230 = vmatpush1.msra.mxu0 0.0
      %231 = vmatprep.subr.mxu0 0.0
      %232 = vmatpush1.msra.mxu0 0.0
      %233 = vmatprep.subr.mxu0 0.0
      %234 = vmatpush1.msra.mxu0 0.0
      %235 = vmatprep.subr.mxu0 0.0
      %236 = vmatpush1.msra.mxu0 0.0
      %237 = vmatprep.subr.mxu0 0.0
      %238 = vmatpush1.msra.mxu0 0.0
      %239 = vmatprep.subr.mxu0 0.0
      %240 = vmatpush1.msra.mxu0 0.0
      %241 = vmatprep.subr.mxu0 0.0
      %242 = vmatpush1.msra.mxu0 0.0
      %243 = vmatprep.subr.mxu0 0.0
      %244 = vmatpush1.msra.mxu0 0.0
      %245 = vmatprep.subr.mxu0 0.0
      %246 = vmatpush1.msra.mxu0 0.0
      %247 = vmatprep.subr.mxu0 0.0
      %248 = vmatpush1.msra.mxu0 0.0
      %249 = vmatprep.subr.mxu0 0.0
      %250 = vmatpush1.msra.mxu0 0.0
      %251 = vmatprep.subr.mxu0 0.0
      %252 = vmatpush1.msra.mxu0 0.0
      %253 = vmatprep.subr.mxu0 0.0
      %254 = vmatpush1.msra.mxu0 0.0
      %255 = vmatprep.subr.mxu0 0.0
      %256 = vmatpush1.msra.mxu0 0.0
      %257 = vmatprep.subr.mxu0 0.0
      %258 = vmatpush1.msra.mxu0 0.0
      %259 = vmatprep.subr.mxu0 0.0
      %260 = vmatpush1.msra.mxu0 0.0
      %261 = vmatprep.subr.mxu0 0.0
      %262 = vmatpush1.msra.mxu0 0.0
      %263 = vmatprep.mubr.f32.mxu0 0.0
      %264 = vmatmul.mubr.f32.gmra.mrb[0].mxu0 %v190
      %v265 = vpop.f32.mrb[0].mxu0
      %v266 = vadd.f32 %v186, %v265
      %v267 = vpop.f32.mrb[0].mxu0
      %v268 = vadd.f32 %v186, %v267
      %269 = vdwg.mxu0
      %270 = vst [vmem:[%s170] sm:$0xff] %v266
      %271 = vst [vmem:[%s170 + $0x8] sm:$0xff] %v268
      %p272 = scmp.lt.s32.totalorder %s14, 1
      %s273 = scalar_select %p272, %s14, 1
      %s274 = smul.addr %s273, 2
      %s275 = smul.addr %s274, 8
      %s276 = scalar_lea.vmem %s3, %s275
      // Predicated region
      $region33: #{conv_same_pad_forward.1} parent=31 // pred_check
        %p277 = pneg %p100
      $region34: #{conv_same_pad_forward.1} parent=31 // pred_check_branch
        %279 = sbr.rel (%p277) target = $region36
      $region35: #{conv_same_pad_forward.1} parent=31 // pred_region
        _
      $region36: #{conv_same_pad_forward.1} parent=31 // pred_fallthru
        _
    $region32: #{conv_same_pad_forward.1} parent=5 // pred_fallthru
      _
    %p280 = scmp.le.s32.totalorder 2, %s9
    // Predicated region
    $region37: #{conv_same_pad_forward.1} parent=5 // pred_check
      %p281 = pneg %p280
    $region38: #{conv_same_pad_forward.1} parent=5 // pred_check_branch
      %283 = sbr.rel (%p281) target = $region40
    $region39: #{conv_same_pad_forward.1} parent=5 // pred_region
      %s284 = ssub.s32 %s9, 2
      // Predicated region
      $region41: #{conv_same_pad_forward.1} parent=39 // pred_check
        %p285 = pneg %p106
      $region42: #{conv_same_pad_forward.1} parent=39 // pred_check_branch
        %287 = sbr.rel (%p285) target = $region44
      $region43: #{conv_same_pad_forward.1} parent=39 // pred_region
        %p288 = scmp.lt.s32.totalorder %s15, 1
        %s289 = scalar_select %p288, %s15, 1
        %s290 = smul.addr %s289, 2
        %s291 = smul.addr %s290, 8
        %s292 = scalar_lea.vmem %s3, %s291
      $region44: #{conv_same_pad_forward.1} parent=39 // pred_fallthru
        _
    $region40: #{conv_same_pad_forward.1} parent=5 // pred_fallthru
      _
  $region6: #{conv_same_pad_forward.1} parent=0 // loop_footer
    %s13 = sadd.s32 1, %s9
  $region7: #{conv_same_pad_forward.1} parent=0 // loop_footer_branch
    %8 = sbr.rel target = $region3
  $region8: #{conv_same_pad_forward.1} parent=0 // loop_exit
    _

</llo_original>
